<compile_context>
chip_gen: v7x
topology: tpu7x:2x2x1
jax: 0.10.0
libtpu: 0.0.40
codegen_flags: <defaults>
</compile_context>

<pallas_src>
import jax
import jax.numpy as jnp
from jax.experimental import pallas as pl
from jax.experimental.pallas import tpu as pltpu


def _round_up(x, m):
    return ((x + m - 1) // m) * m


# --------------------------------------------------------------------------
# Kernels
# --------------------------------------------------------------------------
def _deinterleave_kernel(x_ref, s0_ref, s1_ref, s2_ref):
    """Native-layout de-interleave.

    x_ref: (tile_r, 384).  Lane j of a row = split (j % 3) of triple
    (row*128 + j//3).  Output lane l of split k comes from input lane 3*l + k.
    The gather is kept within 128-lane chunks (canonical dynamic_gather
    pattern); selects pick the chunk that actually holds each element.
    """
    tile_r = s0_ref.shape[0]
    b0 = x_ref[:, 0:128]
    b1 = x_ref[:, 128:256]
    b2 = x_ref[:, 256:384]
    lane = jax.lax.broadcasted_iota(jnp.int32, (tile_r, 128), 1)
    for k, out_ref in enumerate((s0_ref, s1_ref, s2_ref)):
        src = 3 * lane + k                      # source lane in [0, 384)
        chunk = jnp.right_shift(src, 7)         # src // 128
        off = jnp.bitwise_and(src, 127)         # src % 128
        g0 = jnp.take_along_axis(b0, off, axis=1, mode="promise_in_bounds")
        g1 = jnp.take_along_axis(b1, off, axis=1, mode="promise_in_bounds")
        g2 = jnp.take_along_axis(b2, off, axis=1, mode="promise_in_bounds")
        out_ref[...] = jnp.where(chunk == 0, g0,
                                 jnp.where(chunk == 1, g1, g2))


def _split_copy_kernel(xt_ref, s0_ref, s1_ref, s2_ref):
    """Fallback: input already de-interleaved by an XLA transpose outside.

    xt_ref: (3, tile_r, 128); plane k is split k.  Pure sublane/lane-dense copy
    (full-vreg vld/vst).
    """
    s0_ref[...] = xt_ref[0]
    s1_ref[...] = xt_ref[1]
    s2_ref[...] = xt_ref[2]


# --------------------------------------------------------------------------
# pallas_call builders / tiling
# --------------------------------------------------------------------------
def _choose_tile_r(R, max_tile_r=2048):
    if R <= 8:
        return R
    # Keep >= 8 grid steps when possible (v7x megacore sharding), cap the tile
    # so the double-buffered footprint stays ~12 MiB (fits every generation).
    return min(max_tile_r, _round_up(pl.cdiv(R, 8), 8))


def _build_call(kernel, in_spec, R, tile_r, dtype):
    grid = (pl.cdiv(R, tile_r),)
    out_specs = tuple(
        pl.BlockSpec((tile_r, 128), lambda i: (i, 0)) for _ in range(3))
    out_shape = tuple(
        jax.ShapeDtypeStruct((R, 128), dtype) for _ in range(3))
    nbytes = jnp.dtype(dtype).itemsize
    return pl.pallas_call(
        kernel,
        grid=grid,
        in_specs=[in_spec],
        out_specs=out_specs,
        out_shape=out_shape,
        compiler_params=pltpu.CompilerParams(
            dimension_semantics=("parallel",),
            vmem_limit_bytes=48 * 1024 * 1024,
        ),
        cost_estimate=pl.CostEstimate(
            flops=0, transcendentals=0,
            bytes_accessed=2 * R * 384 * nbytes),
    )


# --------------------------------------------------------------------------
# One-time feature detection for the in-kernel lane-gather path.
# --------------------------------------------------------------------------
_USE_GATHER = None


def _gather_path_supported():
    global _USE_GATHER
    if _USE_GATHER is None:
        try:
            probe = jnp.arange(16 * 384, dtype=jnp.float32).reshape(16, 384)
            call = _build_call(
                _deinterleave_kernel,
                pl.BlockSpec((8, 384), lambda i: (i, 0)),
                16, 8, jnp.float32)
            s0, s1, s2 = call(probe)
            jax.block_until_ready((s0, s1, s2))
            ref = probe.reshape(-1).reshape(-1, 3)
            ok = (bool(jnp.array_equal(s0.reshape(-1), ref[:, 0]))
                  and bool(jnp.array_equal(s1.reshape(-1), ref[:, 1]))
                  and bool(jnp.array_equal(s2.reshape(-1), ref[:, 2])))
            _USE_GATHER = ok
        except Exception:
            _USE_GATHER = False
    return _USE_GATHER


# --------------------------------------------------------------------------
# Forward pass
# --------------------------------------------------------------------------
def split_cat_forward(v2):
    """Returns (concatenated_tensor, (split0, split1, split2)) matching the
    PyTorch module semantics. v2 must have shape [B, C, H, 3]."""
    B, C, H, W = v2.shape
    assert W == 3, "split sizes [1,1,1] along dim=3 require v2.shape[3] == 3"
    N = B * C * H
    R = pl.cdiv(N, 128)
    N_pad = R * 128
    tile_r = _choose_tile_r(R)
    dtype = v2.dtype

    if _gather_path_supported():
        # Single Pallas pass over the native layout (no wrapper transpose).
        flat = v2.reshape(-1)                     # free, row-major view
        if N_pad != N:                            # only when N % 128 != 0
            flat = jnp.pad(flat, (0, 3 * (N_pad - N)))
        x2d = flat.reshape(R, 384)
        call = _build_call(
            _deinterleave_kernel,
            pl.BlockSpec((tile_r, 384), lambda i: (i, 0)),
            R, tile_r, dtype)
        s0, s1, s2 = call(x2d)
    else:
        # Robust fallback: one XLA de-interleave pass, then a sublane/lane-
        # dense Pallas copy with big tiles.
        xt = v2.reshape(N, 3).T                   # (3, N)
        if N_pad != N:
            xt = jnp.pad(xt, ((0, 0), (0, N_pad - N)))
        x3d = xt.reshape(3, R, 128)
        call = _build_call(
            _split_copy_kernel,
            pl.BlockSpec((3, tile_r, 128), lambda i: (0, i, 0)),
            R, tile_r, dtype)
        s0, s1, s2 = call(x3d)

    def _finish(s):
        if N_pad != N:
            s = s.reshape(-1)[:N]
        return s.reshape(B, C, H, 1)

    splits = tuple(_finish(s) for s in (s0, s1, s2))
    # torch.cat of the [1,1,1] splits along dim=3 reproduces v2 bit-exactly;
    # JAX arrays are immutable, so returning v2 directly (no copy) is safe.
    return v2, splits


def init_unused_conv_params(key):
    """Deterministic init of the (unused) Conv2d(3, 32, 3, 1, 1) parameters,
    mirroring the module's __init__.  They do not affect the forward pass."""
    k_w, k_b = jax.random.split(key)
    fan_in = 3 * 3 * 3
    bound = 1.0 / (fan_in ** 0.5)
    weight = jax.random.uniform(k_w, (32, 3, 3, 3), jnp.float32, -bound, bound)
    bias = jax.random.uniform(k_b, (32,), jnp.float32, -bound, bound)
    return weight, bias


# --------------------------------------------------------------------------
# Self-test
# --------------------------------------------------------------------------
def _check(v2):
    cat, splits = split_cat_forward(v2)
    jax.block_until_ready(cat)
    jax.block_until_ready(splits)
    ref_splits = (v2[..., 0:1], v2[..., 1:2], v2[..., 2:3])
    assert cat.shape == v2.shape and cat.dtype == v2.dtype
    assert jnp.array_equal(cat, v2)
    for s, r in zip(splits, ref_splits):
        assert s.shape == r.shape and s.dtype == r.dtype
        assert jnp.array_equal(s, r)


if __name__ == "__main__":
    key = jax.random.PRNGKey(0)
    k1, k2, k3, kp = jax.random.split(key, 4)

    _conv_w, _conv_b = init_unused_conv_params(kp)  # unused, mirrors __init__

    # Primary small example: NCH-with-last-dim-3 (the split axis). N = 128.
    _check(jax.random.normal(k1, (2, 4, 16, 3), dtype=jnp.float32))

    # Larger (still small) case: N = 8192 -> R = 64 -> 8 grid steps, exercises
    # the multi-block pipeline and "parallel" grid semantics.
    _check(jax.random.normal(k2, (4, 32, 64, 3), dtype=jnp.float32))

    # Ragged case: N = 300 (not a multiple of 128) exercises the pad/trim path.
    _check(jax.random.normal(k3, (2, 3, 50, 3), dtype=jnp.float32))

    print("KERNEL_OK")
</pallas_src>

<mosaic_0001>
module attributes {stable_mosaic.version = 11 : i64} {
  func.func @_deinterleave_kernel(%arg0: i32, %arg1: memref<8x384xf32, #tpu.memory_space<vmem>>, %arg2: memref<8x128xf32, #tpu.memory_space<vmem>>, %arg3: memref<8x128xf32, #tpu.memory_space<vmem>>, %arg4: memref<8x128xf32, #tpu.memory_space<vmem>>) attributes {dimension_semantics = [#tpu.dimension_semantics<parallel>], iteration_bounds = array<i64: 2>, scalar_prefetch = 0 : i64, scratch_operands = 0 : i64, tpu.core_type = #tpu.core_type<tc>, window_params = [{transform_indices = @transform_0, window_bounds = array<i64: 8, 384>}, {transform_indices = @transform_1, window_bounds = array<i64: 8, 128>}, {transform_indices = @transform_2, window_bounds = array<i64: 8, 128>}, {transform_indices = @transform_3, window_bounds = array<i64: 8, 128>}]} {
    %c0 = arith.constant 0 : index
    %c0_0 = arith.constant 0 : index
    %0 = vector.load %arg1[%c0, %c0_0] : memref<8x384xf32, #tpu.memory_space<vmem>>, vector<8x128xf32>
    %c0_1 = arith.constant 0 : index
    %c128 = arith.constant 128 : index
    %1 = vector.load %arg1[%c0_1, %c128] : memref<8x384xf32, #tpu.memory_space<vmem>>, vector<8x128xf32>
    %c0_2 = arith.constant 0 : index
    %c256 = arith.constant 256 : index
    %2 = vector.load %arg1[%c0_2, %c256] : memref<8x384xf32, #tpu.memory_space<vmem>>, vector<8x128xf32>
    %3 = tpu.iota {dimensions = array<i32: 1>} : vector<8x128xi32>
    %c3_i32 = arith.constant 3 : i32
    %4 = vector.broadcast %c3_i32 : i32 to vector<8x128xi32>
    %5 = arith.muli %4, %3 : vector<8x128xi32>
    %c0_i32 = arith.constant 0 : i32
    %6 = vector.broadcast %c0_i32 : i32 to vector<8x128xi32>
    %7 = arith.addi %5, %6 : vector<8x128xi32>
    %c7_i32 = arith.constant 7 : i32
    %8 = vector.broadcast %c7_i32 : i32 to vector<8x128xi32>
    %9 = arith.shrsi %7, %8 : vector<8x128xi32>
    %c127_i32 = arith.constant 127 : i32
    %10 = vector.broadcast %c127_i32 : i32 to vector<8x128xi32>
    %11 = arith.andi %7, %10 : vector<8x128xi32>
    %12 = vector.shape_cast %11 : vector<8x128xi32> to vector<8x128x1xi32>
    %13 = vector.shape_cast %12 : vector<8x128x1xi32> to vector<8x128xi32>
    %14 = tpu.dynamic_gather %0[%13] in [1] : vector<8x128xf32>, vector<8x128xi32> -> vector<8x128xf32>
    %15 = vector.shape_cast %11 : vector<8x128xi32> to vector<8x128x1xi32>
    %16 = vector.shape_cast %15 : vector<8x128x1xi32> to vector<8x128xi32>
    %17 = tpu.dynamic_gather %1[%16] in [1] : vector<8x128xf32>, vector<8x128xi32> -> vector<8x128xf32>
    %18 = vector.shape_cast %11 : vector<8x128xi32> to vector<8x128x1xi32>
    %19 = vector.shape_cast %18 : vector<8x128x1xi32> to vector<8x128xi32>
    %20 = tpu.dynamic_gather %2[%19] in [1] : vector<8x128xf32>, vector<8x128xi32> -> vector<8x128xf32>
    %c0_i32_3 = arith.constant 0 : i32
    %21 = vector.broadcast %c0_i32_3 : i32 to vector<8x128xi32>
    %22 = arith.cmpi eq, %9, %21 : vector<8x128xi32>
    %c1_i32 = arith.constant 1 : i32
    %23 = vector.broadcast %c1_i32 : i32 to vector<8x128xi32>
    %24 = arith.cmpi eq, %9, %23 : vector<8x128xi32>
    %25 = arith.select %24, %17, %20 : vector<8x128xi1>, vector<8x128xf32>
    %26 = arith.select %22, %14, %25 : vector<8x128xi1>, vector<8x128xf32>
    %c0_4 = arith.constant 0 : index
    %c0_5 = arith.constant 0 : index
    %27 = vector.load %arg2[%c0_4, %c0_5] : memref<8x128xf32, #tpu.memory_space<vmem>>, vector<8x128xf32>
    tpu.vector_store %arg2[%c0_4, %c0_5], %26 {strides = array<i32>} : memref<8x128xf32, #tpu.memory_space<vmem>>, vector<8x128xf32>,
    %c3_i32_6 = arith.constant 3 : i32
    %28 = vector.broadcast %c3_i32_6 : i32 to vector<8x128xi32>
    %29 = arith.muli %28, %3 : vector<8x128xi32>
    %c1_i32_7 = arith.constant 1 : i32
    %30 = vector.broadcast %c1_i32_7 : i32 to vector<8x128xi32>
    %31 = arith.addi %29, %30 : vector<8x128xi32>
    %c7_i32_8 = arith.constant 7 : i32
    %32 = vector.broadcast %c7_i32_8 : i32 to vector<8x128xi32>
    %33 = arith.shrsi %31, %32 : vector<8x128xi32>
    %c127_i32_9 = arith.constant 127 : i32
    %34 = vector.broadcast %c127_i32_9 : i32 to vector<8x128xi32>
    %35 = arith.andi %31, %34 : vector<8x128xi32>
    %36 = vector.shape_cast %35 : vector<8x128xi32> to vector<8x128x1xi32>
    %37 = vector.shape_cast %36 : vector<8x128x1xi32> to vector<8x128xi32>
    %38 = tpu.dynamic_gather %0[%37] in [1] : vector<8x128xf32>, vector<8x128xi32> -> vector<8x128xf32>
    %39 = vector.shape_cast %35 : vector<8x128xi32> to vector<8x128x1xi32>
    %40 = vector.shape_cast %39 : vector<8x128x1xi32> to vector<8x128xi32>
    %41 = tpu.dynamic_gather %1[%40] in [1] : vector<8x128xf32>, vector<8x128xi32> -> vector<8x128xf32>
    %42 = vector.shape_cast %35 : vector<8x128xi32> to vector<8x128x1xi32>
    %43 = vector.shape_cast %42 : vector<8x128x1xi32> to vector<8x128xi32>
    %44 = tpu.dynamic_gather %2[%43] in [1] : vector<8x128xf32>, vector<8x128xi32> -> vector<8x128xf32>
    %c0_i32_10 = arith.constant 0 : i32
    %45 = vector.broadcast %c0_i32_10 : i32 to vector<8x128xi32>
    %46 = arith.cmpi eq, %33, %45 : vector<8x128xi32>
    %c1_i32_11 = arith.constant 1 : i32
    %47 = vector.broadcast %c1_i32_11 : i32 to vector<8x128xi32>
    %48 = arith.cmpi eq, %33, %47 : vector<8x128xi32>
    %49 = arith.select %48, %41, %44 : vector<8x128xi1>, vector<8x128xf32>
    %50 = arith.select %46, %38, %49 : vector<8x128xi1>, vector<8x128xf32>
    %c0_12 = arith.constant 0 : index
    %c0_13 = arith.constant 0 : index
    %51 = vector.load %arg3[%c0_12, %c0_13] : memref<8x128xf32, #tpu.memory_space<vmem>>, vector<8x128xf32>
    tpu.vector_store %arg3[%c0_12, %c0_13], %50 {strides = array<i32>} : memref<8x128xf32, #tpu.memory_space<vmem>>, vector<8x128xf32>,
    %c3_i32_14 = arith.constant 3 : i32
    %52 = vector.broadcast %c3_i32_14 : i32 to vector<8x128xi32>
    %53 = arith.muli %52, %3 : vector<8x128xi32>
    %c2_i32 = arith.constant 2 : i32
    %54 = vector.broadcast %c2_i32 : i32 to vector<8x128xi32>
    %55 = arith.addi %53, %54 : vector<8x128xi32>
    %c7_i32_15 = arith.constant 7 : i32
    %56 = vector.broadcast %c7_i32_15 : i32 to vector<8x128xi32>
    %57 = arith.shrsi %55, %56 : vector<8x128xi32>
    %c127_i32_16 = arith.constant 127 : i32
    %58 = vector.broadcast %c127_i32_16 : i32 to vector<8x128xi32>
    %59 = arith.andi %55, %58 : vector<8x128xi32>
    %60 = vector.shape_cast %59 : vector<8x128xi32> to vector<8x128x1xi32>
    %61 = vector.shape_cast %60 : vector<8x128x1xi32> to vector<8x128xi32>
    %62 = tpu.dynamic_gather %0[%61] in [1] : vector<8x128xf32>, vector<8x128xi32> -> vector<8x128xf32>
    %63 = vector.shape_cast %59 : vector<8x128xi32> to vector<8x128x1xi32>
    %64 = vector.shape_cast %63 : vector<8x128x1xi32> to vector<8x128xi32>
    %65 = tpu.dynamic_gather %1[%64] in [1] : vector<8x128xf32>, vector<8x128xi32> -> vector<8x128xf32>
    %66 = vector.shape_cast %59 : vector<8x128xi32> to vector<8x128x1xi32>
    %67 = vector.shape_cast %66 : vector<8x128x1xi32> to vector<8x128xi32>
    %68 = tpu.dynamic_gather %2[%67] in [1] : vector<8x128xf32>, vector<8x128xi32> -> vector<8x128xf32>
    %c0_i32_17 = arith.constant 0 : i32
    %69 = vector.broadcast %c0_i32_17 : i32 to vector<8x128xi32>
    %70 = arith.cmpi eq, %57, %69 : vector<8x128xi32>
    %c1_i32_18 = arith.constant 1 : i32
    %71 = vector.broadcast %c1_i32_18 : i32 to vector<8x128xi32>
    %72 = arith.cmpi eq, %57, %71 : vector<8x128xi32>
    %73 = arith.select %72, %65, %68 : vector<8x128xi1>, vector<8x128xf32>
    %74 = arith.select %70, %62, %73 : vector<8x128xi1>, vector<8x128xf32>
    %c0_19 = arith.constant 0 : index
    %c0_20 = arith.constant 0 : index
    %75 = vector.load %arg4[%c0_19, %c0_20] : memref<8x128xf32, #tpu.memory_space<vmem>>, vector<8x128xf32>
    tpu.vector_store %arg4[%c0_19, %c0_20], %74 {strides = array<i32>} : memref<8x128xf32, #tpu.memory_space<vmem>>, vector<8x128xf32>,
    return
  }
  func.func @transform_0(%arg0: i32) -> (i32, i32) {
    %c0_i32 = arith.constant 0 : i32
    %c0_i32_0 = arith.constant 0 : i32
    return %arg0, %c0_i32 : i32, i32
  }
  func.func @transform_1(%arg0: i32) -> (i32, i32) {
    %c0_i32 = arith.constant 0 : i32
    %c0_i32_0 = arith.constant 0 : i32
    return %arg0, %c0_i32 : i32, i32
  }
  func.func @transform_2(%arg0: i32) -> (i32, i32) {
    %c0_i32 = arith.constant 0 : i32
    %c0_i32_0 = arith.constant 0 : i32
    return %arg0, %c0_i32 : i32, i32
  }
  func.func @transform_3(%arg0: i32) -> (i32, i32) {
    %c0_i32 = arith.constant 0 : i32
    %c0_i32_0 = arith.constant 0 : i32
    return %arg0, %c0_i32 : i32, i32
  }
}

module attributes {stable_mosaic.version = 11 : i64} {
  func.func @_split_copy_kernel(%arg0: i32, %arg1: memref<3x1x128xf32, #tpu.memory_space<vmem>>, %arg2: memref<1x128xf32, #tpu.memory_space<vmem>>, %arg3: memref<1x128xf32, #tpu.memory_space<vmem>>, %arg4: memref<1x128xf32, #tpu.memory_space<vmem>>) attributes {dimension_semantics = [#tpu.dimension_semantics<parallel>], iteration_bounds = array<i64: 1>, scalar_prefetch = 0 : i64, scratch_operands = 0 : i64, tpu.core_type = #tpu.core_type<tc>, window_params = [{transform_indices = @transform_0, window_bounds = array<i64: 3, 1, 128>}, {transform_indices = @transform_1, window_bounds = array<i64: 1, 128>}, {transform_indices = @transform_2, window_bounds = array<i64: 1, 128>}, {transform_indices = @transform_3, window_bounds = array<i64: 1, 128>}]} {
    %c0 = arith.constant 0 : index
    %c0_0 = arith.constant 0 : index
    %c0_1 = arith.constant 0 : index
    %0 = vector.load %arg1[%c0, %c0_0, %c0_1] : memref<3x1x128xf32, #tpu.memory_space<vmem>>, vector<1x1x128xf32>
    %1 = vector.shape_cast %0 : vector<1x1x128xf32> to vector<1x128xf32>
    %c0_2 = arith.constant 0 : index
    %c0_3 = arith.constant 0 : index
    %2 = vector.load %arg2[%c0_2, %c0_3] : memref<1x128xf32, #tpu.memory_space<vmem>>, vector<1x128xf32>
    tpu.vector_store %arg2[%c0_2, %c0_3], %1 {strides = array<i32>} : memref<1x128xf32, #tpu.memory_space<vmem>>, vector<1x128xf32>,
    %c1 = arith.constant 1 : index
    %c0_4 = arith.constant 0 : index
    %c0_5 = arith.constant 0 : index
    %3 = vector.load %arg1[%c1, %c0_4, %c0_5] : memref<3x1x128xf32, #tpu.memory_space<vmem>>, vector<1x1x128xf32>
    %4 = vector.shape_cast %3 : vector<1x1x128xf32> to vector<1x128xf32>
    %c0_6 = arith.constant 0 : index
    %c0_7 = arith.constant 0 : index
    %5 = vector.load %arg3[%c0_6, %c0_7] : memref<1x128xf32, #tpu.memory_space<vmem>>, vector<1x128xf32>
    tpu.vector_store %arg3[%c0_6, %c0_7], %4 {strides = array<i32>} : memref<1x128xf32, #tpu.memory_space<vmem>>, vector<1x128xf32>,
    %c2 = arith.constant 2 : index
    %c0_8 = arith.constant 0 : index
    %c0_9 = arith.constant 0 : index
    %6 = vector.load %arg1[%c2, %c0_8, %c0_9] : memref<3x1x128xf32, #tpu.memory_space<vmem>>, vector<1x1x128xf32>
    %7 = vector.shape_cast %6 : vector<1x1x128xf32> to vector<1x128xf32>
    %c0_10 = arith.constant 0 : index
    %c0_11 = arith.constant 0 : index
    %8 = vector.load %arg4[%c0_10, %c0_11] : memref<1x128xf32, #tpu.memory_space<vmem>>, vector<1x128xf32>
    tpu.vector_store %arg4[%c0_10, %c0_11], %7 {strides = array<i32>} : memref<1x128xf32, #tpu.memory_space<vmem>>, vector<1x128xf32>,
    return
  }
  func.func @transform_0(%arg0: i32) -> (i32, i32, i32) {
    %c0_i32 = arith.constant 0 : i32
    %c0_i32_0 = arith.constant 0 : i32
    %c0_i32_1 = arith.constant 0 : i32
    return %c0_i32, %arg0, %c0_i32_0 : i32, i32, i32
  }
  func.func @transform_1(%arg0: i32) -> (i32, i32) {
    %c0_i32 = arith.constant 0 : i32
    %c0_i32_0 = arith.constant 0 : i32
    return %arg0, %c0_i32 : i32, i32
  }
  func.func @transform_2(%arg0: i32) -> (i32, i32) {
    %c0_i32 = arith.constant 0 : i32
    %c0_i32_0 = arith.constant 0 : i32
    return %arg0, %c0_i32 : i32, i32
  }
  func.func @transform_3(%arg0: i32) -> (i32, i32) {
    %c0_i32 = arith.constant 0 : i32
    %c0_i32_0 = arith.constant 0 : i32
    return %arg0, %c0_i32 : i32, i32
  }
}

</mosaic_0001>

<llo_original>
// kernel: tpu_custom_call.1
$region0: #{tpu_custom_call.1}
  #allocation0 [shape = 'u32[]', space=smem, size = 0x4, offset = 0x4, fixed_abs, tag = 'smem constant byte address 0x4 - core index']
  #allocation1 [shape = 'u32[144,128]{1,0:T(1,128)}', space=vmem, size = 0x12000, scoped, tag = 'internal scratch']
  %s0 = inlined_call_operand.hbm [shape: f32[16,384], index: 0, kind: input, shape index: {}]
  %s1 = inlined_call_operand.hbm [shape: f32[16,128], index: 1, kind: output, shape index: {0}]
  %s2 = inlined_call_operand.hbm [shape: f32[16,128], index: 2, kind: output, shape index: {1}]
  %s3 = inlined_call_operand.hbm [shape: f32[16,128], index: 3, kind: output, shape index: {2}]
  %4 = xla_tuple %s1, %s2, %s3
  %s5 = sld [smem:[#allocation0]]
  $region57: #{tpu_custom_call.1} parent=0
    _
  %s7 = ssub.s32 1, %s5
  %s8 = scalar_select 0, %s7, %s5
  $region1: #{tpu_custom_call.1} parent=0
    #allocation2 [shape = 'u8[24576]{0}', space=vmem, size = 0x6000, scoped, tag = 'input window, operand 0']
    #allocation3 [shape = 's32[2]{0}', space=sflag, size = 0x8, scoped, tag = 'scoped memory for tpu_custom_call.1']
    #allocation4 [shape = 's32[2]{0}', space=sflag, size = 0x8, scoped, tag = 'scoped memory for tpu_custom_call.1']
    #allocation5 [shape = 'u8[8192]{0}', space=vmem, size = 0x2000, scoped, tag = 'output window, operand 0']
    #allocation6 [shape = 'u8[8192]{0}', space=vmem, size = 0x2000, scoped, tag = 'output window, operand 1']
    #allocation7 [shape = 's32[2]{0}', space=sflag, size = 0x8, scoped, tag = 'scoped memory for tpu_custom_call.1']
    #allocation8 [shape = 'u8[8192]{0}', space=vmem, size = 0x2000, scoped, tag = 'output window, operand 2']
    %9 = vsyncpa [#allocation3], 0
    %s10 = scalar_lea.sflag [#allocation3], 1
    %11 = vsyncpa %s10, 0
    %12 = vsyncpa [#allocation4], 0
    %s13 = scalar_lea.sflag [#allocation4], 1
    %14 = vsyncpa %s13, 0
    %15 = vsyncpa [#allocation7], 0
    %s16 = scalar_lea.sflag [#allocation7], 1
    %17 = vsyncpa %s16, 0
    loop: start=0, step=1, limit=4
    $region2: #{tpu_custom_call.1} parent=1 // loop_pre_header
      _
    $region3: #{tpu_custom_call.1} parent=1 // loop_header
      %s19 = sphi 0, %s23
      %p20 = scmp.ge.s32.totalorder %s19, 4
      %s29 = sphi 0, %s31
      %s32 = sphi 0, %s29
      %s33 = sphi 0, %s32
      %s49 = sphi 0, %s33
      %s55 = sphi 0, %s57
      %s58 = sphi 0, %s55
      %s59 = sphi 0, %s58
      %s75 = sphi 0, %s59
      %s81 = sphi 0, %s83
      %s84 = sphi 0, %s81
      %s85 = sphi 0, %s84
      %s101 = sphi 0, %s85
      %s107 = sphi 0, %s109
      %s110 = sphi 0, %s107
      %s111 = sphi 0, %s110
      %s127 = sphi 0, %s111
    $region4: #{tpu_custom_call.1} parent=1 // loop_header_branch
      %22 = sbr.rel (%p20) target = $region8
    $region5: #{tpu_custom_call.1} parent=1 // loop_body
      %s24 = ssub.s32 %s19, 1
      %s25 = ssub.s32 %s19, 2
      %s26 = sadd.s32 %s19, 1
      %s27 = ssub.s32 %s19, %s26
      %p28 = scmp.eq.s32.totalorder %s27, 0
      %s30 = sadd.s32 %s29, 1
      %s31 = scalar_select %p28, %s29, %s30
      %p34 = pneg %p28
      %p35 = scmp.eq.s32.totalorder %s19, 1
      %p36 = por %p34, %p35
      %p37 = scmp.ne.s32.totalorder %s29, %s32
      %p38 = scmp.eq.s32.totalorder %s19, 0
      %p39 = por %p37, %p38
      %p40 = scmp.ne.s32.totalorder %s29, %s32
      %p41 = scmp.eq.s32.totalorder %s24, 1
      %p42 = por %p40, %p41
      %p43 = scmp.ne.s32.totalorder %s32, %s33
      %p44 = scmp.eq.s32.totalorder %s24, 0
      %p45 = por %p43, %p44
      %p46 = scmp.ne.s32.totalorder %s32, %s33
      %p47 = scmp.eq.s32.totalorder %s25, 1
      %p48 = por %p46, %p47
      %p50 = scmp.ne.s32.totalorder %s33, %s49
      %p51 = scmp.eq.s32.totalorder %s25, 0
      %p52 = por %p50, %p51
      %s53 = ssub.s32 %s19, %s26
      %p54 = scmp.eq.s32.totalorder %s53, 0
      %s56 = sadd.s32 %s55, 1
      %s57 = scalar_select %p54, %s55, %s56
      %p60 = pneg %p54
      %p61 = scmp.eq.s32.totalorder %s19, 1
      %p62 = por %p60, %p61
      %p63 = scmp.ne.s32.totalorder %s55, %s58
      %p64 = scmp.eq.s32.totalorder %s19, 0
      %p65 = por %p63, %p64
      %p66 = scmp.ne.s32.totalorder %s55, %s58
      %p67 = scmp.eq.s32.totalorder %s24, 1
      %p68 = por %p66, %p67
      %p69 = scmp.ne.s32.totalorder %s58, %s59
      %p70 = scmp.eq.s32.totalorder %s24, 0
      %p71 = por %p69, %p70
      %p72 = scmp.ne.s32.totalorder %s58, %s59
      %p73 = scmp.eq.s32.totalorder %s25, 1
      %p74 = por %p72, %p73
      %p76 = scmp.ne.s32.totalorder %s59, %s75
      %p77 = scmp.eq.s32.totalorder %s25, 0
      %p78 = por %p76, %p77
      %s79 = ssub.s32 %s19, %s26
      %p80 = scmp.eq.s32.totalorder %s79, 0
      %s82 = sadd.s32 %s81, 1
      %s83 = scalar_select %p80, %s81, %s82
      %p86 = pneg %p80
      %p87 = scmp.eq.s32.totalorder %s19, 1
      %p88 = por %p86, %p87
      %p89 = scmp.ne.s32.totalorder %s81, %s84
      %p90 = scmp.eq.s32.totalorder %s19, 0
      %p91 = por %p89, %p90
      %p92 = scmp.ne.s32.totalorder %s81, %s84
      %p93 = scmp.eq.s32.totalorder %s24, 1
      %p94 = por %p92, %p93
      %p95 = scmp.ne.s32.totalorder %s84, %s85
      %p96 = scmp.eq.s32.totalorder %s24, 0
      %p97 = por %p95, %p96
      %p98 = scmp.ne.s32.totalorder %s84, %s85
      %p99 = scmp.eq.s32.totalorder %s25, 1
      %p100 = por %p98, %p99
      %p102 = scmp.ne.s32.totalorder %s85, %s101
      %p103 = scmp.eq.s32.totalorder %s25, 0
      %p104 = por %p102, %p103
      %s105 = ssub.s32 %s19, %s26
      %p106 = scmp.eq.s32.totalorder %s105, 0
      %s108 = sadd.s32 %s107, 1
      %s109 = scalar_select %p106, %s107, %s108
      %p112 = pneg %p106
      %p113 = scmp.eq.s32.totalorder %s19, 1
      %p114 = por %p112, %p113
      %p115 = scmp.ne.s32.totalorder %s107, %s110
      %p116 = scmp.eq.s32.totalorder %s19, 0
      %p117 = por %p115, %p116
      %p118 = scmp.ne.s32.totalorder %s107, %s110
      %p119 = scmp.eq.s32.totalorder %s24, 1
      %p120 = por %p118, %p119
      %p121 = scmp.ne.s32.totalorder %s110, %s111
      %p122 = scmp.eq.s32.totalorder %s24, 0
      %p123 = por %p121, %p122
      %p124 = scmp.ne.s32.totalorder %s110, %s111
      %p125 = scmp.eq.s32.totalorder %s25, 1
      %p126 = por %p124, %p125
      %p128 = scmp.ne.s32.totalorder %s111, %s127
      %p129 = scmp.eq.s32.totalorder %s25, 0
      %p130 = por %p128, %p129
      %p131 = scmp.le.s32.totalorder 1, %s19
      %p132 = scmp.lt.s32.totalorder %s19, 3
      %p133 = pnand %p131, %p132
      %p134 = pneg %p133
      // Predicated region
      $region9: #{tpu_custom_call.1} parent=5 // pred_check
        _
      $region10: #{tpu_custom_call.1} parent=5 // pred_check_branch
        %136 = sbr.rel (%p133) target = $region12
      $region11: #{tpu_custom_call.1} parent=5 // pred_region
        %s137 = ssub.s32 %s19, 1
      $region12: #{tpu_custom_call.1} parent=5 // pred_fallthru
        _
      %p138 = scmp.lt.s32.totalorder %s19, 2
      // Predicated region
      $region13: #{tpu_custom_call.1} parent=5 // pred_check
        %p139 = pneg %p138
      $region14: #{tpu_custom_call.1} parent=5 // pred_check_branch
        %141 = sbr.rel (%p139) target = $region16
      $region15: #{tpu_custom_call.1} parent=5 // pred_region
        // Predicated region
        $region17: #{tpu_custom_call.1} parent=15 // pred_check
          %p142 = pneg %p39
        $region18: #{tpu_custom_call.1} parent=15 // pred_check_branch
          %144 = sbr.rel (%p142) target = $region20
        $region19: #{tpu_custom_call.1} parent=15 // pred_region
          %s145 = sand.u32 %s29, 1
          %s146 = scalar_lea.sflag [#allocation3], %s145
          %s147 = sand.u32 %s29, 1
          %s148 = smul.addr %s147, 24
          %s149 = scalar_lea.vmem [#allocation2], %s148
          %s151 = ssub.s32 384, 384
          %152 = vsyncadd %s146, %s151
          %s153 = smul.addr %s19, 3
          %s154 = smul.addr %s153, 128
          %s155 = scalar_lea.hbm %s0, %s154
          %s157 = sshll.u32 %s149, 4
          %s158 = int_to_ptr.vmem [resolvable:$true] %s157
          %160 = dma.hbm_to_vmem [thread:$0]  %s155, 384, %s158, %s146
        $region20: #{tpu_custom_call.1} parent=15 // pred_fallthru
          _
      $region16: #{tpu_custom_call.1} parent=5 // pred_fallthru
        _
      %p161 = scmp.le.s32.totalorder 1, %s19
      %p162 = scmp.lt.s32.totalorder %s19, 3
      %p163 = pnand %p161, %p162
      %p164 = pneg %p163
      // Predicated region
      $region21: #{tpu_custom_call.1} parent=5 // pred_check
        _
      $region22: #{tpu_custom_call.1} parent=5 // pred_check_branch
        %166 = sbr.rel (%p163) target = $region24
      $region23: #{tpu_custom_call.1} parent=5 // pred_region
        %s167 = ssub.s32 %s19, 1
        %s168 = sand.u32 %s32, 1
        %s169 = scalar_lea.sflag [#allocation3], %s168
        %s170 = sand.u32 %s32, 1
        %s171 = smul.addr %s170, 24
        %s172 = scalar_lea.vmem [#allocation2], %s171
        // Predicated region
        $region25: #{tpu_custom_call.1} parent=23 // pred_check
          %p173 = pneg %p45
        $region26: #{tpu_custom_call.1} parent=23 // pred_check_branch
          %175 = sbr.rel (%p173) target = $region28
        $region27: #{tpu_custom_call.1} parent=23 // pred_region
          %176 = dma.done %s169, 384
        $region28: #{tpu_custom_call.1} parent=23 // pred_fallthru
          _
        %s177 = sand.u32 %s32, 1
        %s178 = scalar_lea.sflag [#allocation3], %s177
        %s179 = sand.u32 %s32, 1
        %s180 = smul.addr %s179, 24
        %s181 = scalar_lea.vmem [#allocation2], %s180
        %p182 = pneg %p45
        %p183 = pneg %p42
        %p184 = pneg %p71
        %p185 = pneg %p68
        %s186 = sand.u32 %s58, 1
        %s187 = scalar_lea.sflag [#allocation4], %s186
        %s188 = sand.u32 %s58, 1
        %s189 = smul.addr %s188, 8
        %s190 = scalar_lea.vmem [#allocation5], %s189
        %p191 = pneg %p97
        %p192 = pneg %p94
        %s193 = sand.u32 %s24, 1
        %s194 = scalar_lea.sflag [#allocation7], %s193
        %s195 = sand.u32 %s84, 1
        %s196 = smul.addr %s195, 8
        %s197 = scalar_lea.vmem [#allocation6], %s196
        %p198 = pneg %p123
        %p199 = pneg %p120
        %s200 = sand.u32 %s24, 1
        %s201 = scalar_lea.sflag [#allocation7], %s200
        %s202 = sand.u32 %s110, 1
        %s203 = smul.addr %s202, 8
        %s204 = scalar_lea.vmem [#allocation8], %s203
        %v205 = vld [vmem:[%s172] sm:$0xff]
        %v206 = vld [vmem:[%s172 + $0x8] sm:$0xff]
        %v207 = vld [vmem:[%s172 + $0x10] sm:$0xff]
        %v208 = vlaneseq
        %v209 = vand.u32 %v208, 127
        %v210 = vmul.u32 %v209, 3
        %v211 = vshra.s32 %v210, 7
        %v212 = vand.u32 %v210, 127
        %213 = vset.pattern.permute.xlu0 %v212
        %214 = vperm.xlu0 %213, %v205
        %v215 = vpop.permute.xlu0 %214
        %216 = vset.pattern.permute.xlu0 %v212
        %217 = vperm.xlu0 %216, %v206
        %v218 = vpop.permute.xlu0 %217
        %219 = vset.pattern.permute.xlu0 %v212
        %220 = vperm.xlu0 %219, %v207
        %v221 = vpop.permute.xlu0 %220
        %vm222 = vcmp.eq.s32.totalorder %v211, 0
        %vm223 = vcmp.eq.s32.totalorder %v211, 1
        %v224 = vsel %vm223, %v218, %v221
        %v225 = vsel %vm222, %v215, %v224
        %226 = vst [vmem:[%s190] sm:$0xff] %v225
        %v227 = vadd.s32 %v210, 1
        %v228 = vshra.s32 %v227, 7
        %v229 = vand.u32 %v227, 127
        %230 = vset.pattern.permute.xlu0 %v229
        %231 = vperm.xlu0 %230, %v205
        %v232 = vpop.permute.xlu0 %231
        %233 = vset.pattern.permute.xlu0 %v229
        %234 = vperm.xlu0 %233, %v206
        %v235 = vpop.permute.xlu0 %234
        %236 = vset.pattern.permute.xlu0 %v229
        %237 = vperm.xlu0 %236, %v207
        %v238 = vpop.permute.xlu0 %237
        %vm239 = vcmp.eq.s32.totalorder %v228, 0
        %vm240 = vcmp.eq.s32.totalorder %v228, 1
        %v241 = vsel %vm240, %v235, %v238
        %v242 = vsel %vm239, %v232, %v241
        %243 = vst [vmem:[%s197] sm:$0xff] %v242
        %v244 = vadd.s32 %v210, 2
        %v245 = vshra.s32 %v244, 7
        %v246 = vand.u32 %v244, 127
        %247 = vset.pattern.permute.xlu0 %v246
        %248 = vperm.xlu0 %247, %v205
        %v249 = vpop.permute.xlu0 %248
        %250 = vset.pattern.permute.xlu0 %v246
        %251 = vperm.xlu0 %250, %v206
        %v252 = vpop.permute.xlu0 %251
        %253 = vset.pattern.permute.xlu0 %v246
        %254 = vperm.xlu0 %253, %v207
        %v255 = vpop.permute.xlu0 %254
        %vm256 = vcmp.eq.s32.totalorder %v245, 0
        %vm257 = vcmp.eq.s32.totalorder %v245, 1
        %v258 = vsel %vm257, %v252, %v255
        %v259 = vsel %vm256, %v249, %v258
        %260 = vst [vmem:[%s204] sm:$0xff] %v259
        %s261 = sand.u32 %s58, 1
        %s262 = scalar_lea.sflag [#allocation4], %s261
        %s263 = sand.u32 %s58, 1
        %s264 = smul.addr %s263, 8
        %s265 = scalar_lea.vmem [#allocation5], %s264
        %s266 = sand.u32 %s24, 1
        %s267 = scalar_lea.sflag [#allocation7], %s266
        %s268 = sand.u32 %s84, 1
        %s269 = smul.addr %s268, 8
        %s270 = scalar_lea.vmem [#allocation6], %s269
        %s271 = sand.u32 %s24, 1
        %s272 = scalar_lea.sflag [#allocation7], %s271
        %s273 = sand.u32 %s110, 1
        %s274 = smul.addr %s273, 8
        %s275 = scalar_lea.vmem [#allocation8], %s274
        // Predicated region
        $region29: #{tpu_custom_call.1} parent=23 // pred_check
          %p276 = pneg %p68
        $region30: #{tpu_custom_call.1} parent=23 // pred_check_branch
          %278 = sbr.rel (%p276) target = $region32
        $region31: #{tpu_custom_call.1} parent=23 // pred_region
          %s280 = ssub.s32 128, 128
          %281 = vsyncadd %s262, %s280
          %s282 = smul.addr %s24, 128
          %s283 = scalar_lea.hbm %s1, %s282
          %s285 = sshll.u32 %s265, 4
          %s286 = int_to_ptr.vmem [resolvable:$true] %s285
          %288 = dma.vmem_to_hbm [thread:$0]  %s286, 128, %s283, %s262
        $region32: #{tpu_custom_call.1} parent=23 // pred_fallthru
          _
        // Predicated region
        $region33: #{tpu_custom_call.1} parent=23 // pred_check
          %p289 = pneg %p94
        $region34: #{tpu_custom_call.1} parent=23 // pred_check_branch
          %291 = sbr.rel (%p289) target = $region36
        $region35: #{tpu_custom_call.1} parent=23 // pred_region
          %s293 = ssub.s32 128, 128
          %294 = vsyncadd %s267, %s293
          %s295 = smul.addr %s24, 128
          %s296 = scalar_lea.hbm %s2, %s295
          %s298 = sshll.u32 %s270, 4
          %s299 = int_to_ptr.vmem [resolvable:$true] %s298
          %301 = dma.vmem_to_hbm [thread:$0]  %s299, 128, %s296, %s267
        $region36: #{tpu_custom_call.1} parent=23 // pred_fallthru
          _
        // Predicated region
        $region37: #{tpu_custom_call.1} parent=23 // pred_check
          %p302 = pneg %p120
        $region38: #{tpu_custom_call.1} parent=23 // pred_check_branch
          %304 = sbr.rel (%p302) target = $region40
        $region39: #{tpu_custom_call.1} parent=23 // pred_region
          %s306 = ssub.s32 128, 128
          %307 = vsyncadd %s272, %s306
          %s308 = smul.addr %s24, 128
          %s309 = scalar_lea.hbm %s3, %s308
          %s311 = sshll.u32 %s275, 4
          %s312 = int_to_ptr.vmem [resolvable:$true] %s311
          %314 = dma.vmem_to_hbm [thread:$0]  %s312, 128, %s309, %s272
        $region40: #{tpu_custom_call.1} parent=23 // pred_fallthru
          _
      $region24: #{tpu_custom_call.1} parent=5 // pred_fallthru
        _
      %p315 = scmp.le.s32.totalorder 2, %s19
      // Predicated region
      $region41: #{tpu_custom_call.1} parent=5 // pred_check
        %p316 = pneg %p315
      $region42: #{tpu_custom_call.1} parent=5 // pred_check_branch
        %318 = sbr.rel (%p316) target = $region44
      $region43: #{tpu_custom_call.1} parent=5 // pred_region
        %s319 = ssub.s32 %s19, 2
        // Predicated region
        $region45: #{tpu_custom_call.1} parent=43 // pred_check
          %p320 = pneg %p74
        $region46: #{tpu_custom_call.1} parent=43 // pred_check_branch
          %322 = sbr.rel (%p320) target = $region48
        $region47: #{tpu_custom_call.1} parent=43 // pred_region
          %s323 = sand.u32 %s59, 1
          %s324 = scalar_lea.sflag [#allocation4], %s323
          %s325 = sand.u32 %s59, 1
          %s326 = smul.addr %s325, 8
          %s327 = scalar_lea.vmem [#allocation5], %s326
          %328 = dma.done %s324, 128
        $region48: #{tpu_custom_call.1} parent=43 // pred_fallthru
          _
        // Predicated region
        $region49: #{tpu_custom_call.1} parent=43 // pred_check
          %p329 = pneg %p100
        $region50: #{tpu_custom_call.1} parent=43 // pred_check_branch
          %331 = sbr.rel (%p329) target = $region52
        $region51: #{tpu_custom_call.1} parent=43 // pred_region
          %s332 = sand.u32 %s25, 1
          %s333 = scalar_lea.sflag [#allocation7], %s332
          %s334 = sand.u32 %s85, 1
          %s335 = smul.addr %s334, 8
          %s336 = scalar_lea.vmem [#allocation6], %s335
          %337 = dma.done %s333, 128
        $region52: #{tpu_custom_call.1} parent=43 // pred_fallthru
          _
        // Predicated region
        $region53: #{tpu_custom_call.1} parent=43 // pred_check
          %p338 = pneg %p126
        $region54: #{tpu_custom_call.1} parent=43 // pred_check_branch
          %340 = sbr.rel (%p338) target = $region56
        $region55: #{tpu_custom_call.1} parent=43 // pred_region
          %s341 = sand.u32 %s25, 1
          %s342 = scalar_lea.sflag [#allocation7], %s341
          %s343 = sand.u32 %s111, 1
          %s344 = smul.addr %s343, 8
          %s345 = scalar_lea.vmem [#allocation8], %s344
          %346 = dma.done %s342, 128
        $region56: #{tpu_custom_call.1} parent=43 // pred_fallthru
          _
      $region44: #{tpu_custom_call.1} parent=5 // pred_fallthru
        _
    $region6: #{tpu_custom_call.1} parent=1 // loop_footer
      %s23 = sadd.s32 1, %s19
    $region7: #{tpu_custom_call.1} parent=1 // loop_footer_branch
      %18 = sbr.rel target = $region3
    $region8: #{tpu_custom_call.1} parent=1 // loop_exit
      _
    %347 = vsyncpa [#allocation3], 1
    %s348 = scalar_lea.sflag [#allocation3], 1
    %349 = vsyncpa %s348, 1
    %350 = vsyncpa [#allocation4], 1
    %s351 = scalar_lea.sflag [#allocation4], 1
    %352 = vsyncpa %s351, 1
    %353 = vsyncpa [#allocation7], 1
    %s354 = scalar_lea.sflag [#allocation7], 1
    %355 = vsyncpa %s354, 1

// kernel: tpu_custom_call.1
$region0: #{tpu_custom_call.1}
  #allocation0 [shape = 'u32[]', space=smem, size = 0x4, offset = 0x4, fixed_abs, tag = 'smem constant byte address 0x4 - core index']
  #allocation1 [shape = 'u32[144,128]{1,0:T(1,128)}', space=vmem, size = 0x12000, scoped, tag = 'internal scratch']
  %s0 = inlined_call_operand.hbm [shape: f32[3,1,128], index: 0, kind: input, shape index: {}]
  %s1 = inlined_call_operand.hbm [shape: f32[1,128], index: 1, kind: output, shape index: {0}]
  %s2 = inlined_call_operand.hbm [shape: f32[1,128], index: 2, kind: output, shape index: {1}]
  %s3 = inlined_call_operand.hbm [shape: f32[1,128], index: 3, kind: output, shape index: {2}]
  %4 = xla_tuple %s1, %s2, %s3
  %s5 = sld [smem:[#allocation0]]
  $region34: #{tpu_custom_call.1} parent=0
    _
  %s7 = ssub.s32 1, %s5
  %s8 = scalar_select 0, %s7, %s5
  $region1: #{tpu_custom_call.1} parent=0
    #allocation2 [shape = 'u8[1536]{0}', space=vmem, size = 0x800, scoped, tag = 'input window, operand 0, single buffered']
    #allocation3 [shape = 's32[1]{0}', space=sflag, size = 0x4, scoped, tag = 'scoped memory for tpu_custom_call.1']
    #allocation4 [shape = 's32[1]{0}', space=sflag, size = 0x4, scoped, tag = 'scoped memory for tpu_custom_call.1']
    #allocation5 [shape = 'u8[512]{0}', space=vmem, size = 0x400, scoped, tag = 'output window, operand 0, single buffered']
    #allocation6 [shape = 'u8[512]{0}', space=vmem, size = 0x400, scoped, tag = 'output window, operand 1, single buffered']
    #allocation7 [shape = 's32[1]{0}', space=sflag, size = 0x4, scoped, tag = 'scoped memory for tpu_custom_call.1']
    #allocation8 [shape = 'u8[512]{0}', space=vmem, size = 0x400, scoped, tag = 'output window, operand 2, single buffered']
    %9 = vsyncpa [#allocation3], 0
    %10 = vsyncpa [#allocation4], 0
    %11 = vsyncpa [#allocation7], 0
    // Predicated region
    $region2: #{tpu_custom_call.1} parent=1 // pred_check
      _
    $region3: #{tpu_custom_call.1} parent=1 // pred_check_branch
      %13 = sbr.rel (0) target = $region5
    $region4: #{tpu_custom_call.1} parent=1 // pred_region
      %s15 = ssub.s32 48, 48
      %16 = vsyncadd [#allocation3], %s15
      %s17 = sshll.u32 [#allocation2], 4
      %s18 = int_to_ptr.vmem [resolvable:$true] %s17
      %23 = dma.hbm_to_vmem [thread:$0]  %s0, 48, %s18, [#allocation3], 16, 16, 1
    $region5: #{tpu_custom_call.1} parent=1 // pred_fallthru
      _
    // Predicated region
    $region6: #{tpu_custom_call.1} parent=1 // pred_check
      _
    $region7: #{tpu_custom_call.1} parent=1 // pred_check_branch
      %25 = sbr.rel (0) target = $region9
    $region8: #{tpu_custom_call.1} parent=1 // pred_region
      %26 = dma.done [#allocation3], 48
    $region9: #{tpu_custom_call.1} parent=1 // pred_fallthru
      _
    %v27 = vld [vmem:[#allocation2] sm:$0x1]
    %28 = vst [vmem:[#allocation5] sm:$0x1] %v27
    %s29 = scalar_lea.vmem [#allocation2], 1
    %v30 = vld [vmem:[%s29] sm:$0x1]
    %31 = vst [vmem:[#allocation6] sm:$0x1] %v30
    %s32 = scalar_lea.vmem [#allocation2], 2
    %v33 = vld [vmem:[%s32] sm:$0x1]
    %34 = vst [vmem:[#allocation8] sm:$0x1] %v33
    // Predicated region
    $region10: #{tpu_custom_call.1} parent=1 // pred_check
      _
    $region11: #{tpu_custom_call.1} parent=1 // pred_check_branch
      %36 = sbr.rel (0) target = $region13
    $region12: #{tpu_custom_call.1} parent=1 // pred_region
      %s38 = ssub.s32 16, 16
      %39 = vsyncadd [#allocation4], %s38
      %s41 = sshll.u32 [#allocation5], 4
      %s42 = int_to_ptr.vmem [resolvable:$true] %s41
      %44 = dma.vmem_to_hbm [thread:$0]  %s42, 16, %s1, [#allocation4]
    $region13: #{tpu_custom_call.1} parent=1 // pred_fallthru
      _
    // Predicated region
    $region14: #{tpu_custom_call.1} parent=1 // pred_check
      _
    $region15: #{tpu_custom_call.1} parent=1 // pred_check_branch
      %46 = sbr.rel (0) target = $region17
    $region16: #{tpu_custom_call.1} parent=1 // pred_region
      %s48 = ssub.s32 16, 16
      %49 = vsyncadd [#allocation7], %s48
      %s51 = sshll.u32 [#allocation6], 4
      %s52 = int_to_ptr.vmem [resolvable:$true] %s51
      %54 = dma.vmem_to_hbm [thread:$0]  %s52, 16, %s2, [#allocation7]
    $region17: #{tpu_custom_call.1} parent=1 // pred_fallthru
      _
    // Predicated region
    $region18: #{tpu_custom_call.1} parent=1 // pred_check
      _
    $region19: #{tpu_custom_call.1} parent=1 // pred_check_branch
      %56 = sbr.rel (0) target = $region21
    $region20: #{tpu_custom_call.1} parent=1 // pred_region
      %s58 = ssub.s32 16, 16
      %59 = vsyncadd [#allocation7], %s58
      %s61 = sshll.u32 [#allocation8], 4
      %s62 = int_to_ptr.vmem [resolvable:$true] %s61
      %64 = dma.vmem_to_hbm [thread:$0]  %s62, 16, %s3, [#allocation7]
    $region21: #{tpu_custom_call.1} parent=1 // pred_fallthru
      _
    // Predicated region
    $region22: #{tpu_custom_call.1} parent=1 // pred_check
      _
    $region23: #{tpu_custom_call.1} parent=1 // pred_check_branch
      %66 = sbr.rel (0) target = $region25
    $region24: #{tpu_custom_call.1} parent=1 // pred_region
      %67 = dma.done [#allocation4], 16
    $region25: #{tpu_custom_call.1} parent=1 // pred_fallthru
      _
    // Predicated region
    $region26: #{tpu_custom_call.1} parent=1 // pred_check
      _
    $region27: #{tpu_custom_call.1} parent=1 // pred_check_branch
      %69 = sbr.rel (0) target = $region29
    $region28: #{tpu_custom_call.1} parent=1 // pred_region
      %70 = dma.done [#allocation7], 16
    $region29: #{tpu_custom_call.1} parent=1 // pred_fallthru
      _
    // Predicated region
    $region30: #{tpu_custom_call.1} parent=1 // pred_check
      _
    $region31: #{tpu_custom_call.1} parent=1 // pred_check_branch
      %72 = sbr.rel (0) target = $region33
    $region32: #{tpu_custom_call.1} parent=1 // pred_region
      %73 = dma.done [#allocation7], 16
    $region33: #{tpu_custom_call.1} parent=1 // pred_fallthru
      _
    %74 = vsyncpa [#allocation3], 1
    %75 = vsyncpa [#allocation4], 1
    %76 = vsyncpa [#allocation7], 1

</llo_original>
